<compile_context>
chip_gen: v7x
topology: tpu7x:2x2x1
jax: 0.10.0
libtpu: 0.0.40
codegen_flags: <defaults>
</compile_context>

<pallas_src>
import functools

import jax
import jax.numpy as jnp
from jax.experimental import pallas as pl
from jax.experimental.pallas import tpu as pltpu

LANE = 128
SUBLANE = 8
BN_EPS = 1e-5


# ---------------------------------------------------------------------------
# Fused kernel:  relu(x @ W1' + b1') @ W2' + b2'
# (Linear bias + eval-mode BatchNorm already folded into W1'/b1'/W2'/b2';
#  x/W in bf16 for the MXU, accumulation + bias + ReLU in f32.)
# ---------------------------------------------------------------------------
def embedding_transform2_kernel(x_ref, w1_ref, b1_ref, w2_ref, b2_ref, o_ref):
    h = jnp.dot(x_ref[...], w1_ref[...], preferred_element_type=jnp.float32)
    h = jnp.maximum(h + b1_ref[...], 0.0)
    o_ref[...] = jnp.dot(h.astype(jnp.bfloat16), w2_ref[...],
                         preferred_element_type=jnp.float32) + b2_ref[...]


# ---------------------------------------------------------------------------
# One-time parameter prep: fold Linear bias + eval-mode BN into weights,
# transpose to (in, out), pad OUTPUT feature dims to 128 lanes (K rows of W1'
# stay unpadded to match the unpadded x block), cast weights to bf16.
# ---------------------------------------------------------------------------
def _round_up(n, m):
    return ((n + m - 1) // m) * m


def _pad2d(a, rows, cols):
    return jnp.pad(a, ((0, rows - a.shape[0]), (0, cols - a.shape[1])))


def prepare_params(torch_params, eps=BN_EPS):
    """torch layout: w (out, in), b (out,), BN gamma/beta/mean/var (out,)."""
    w1, b1, g1, be1, m1, v1, w2, b2, g2, be2, m2, v2 = torch_params
    s1 = g1 / jnp.sqrt(v1 + eps)
    s2 = g2 / jnp.sqrt(v2 + eps)
    w1f = w1.T * s1[None, :]                 # (in, hidden)
    b1f = (b1 - m1) * s1 + be1               # (hidden,)
    w2f = w2.T * s2[None, :]                 # (hidden, out)
    b2f = (b2 - m2) * s2 + be2               # (out,)

    in_f, hid_f = w1f.shape
    out_f = w2f.shape[1]
    hid_p = _round_up(hid_f, LANE)
    out_p = _round_up(out_f, LANE)

    w1_p = _pad2d(w1f, in_f, hid_p).astype(jnp.bfloat16)     # (in_f, hid_p), K unpadded
    b1_p = _pad2d(b1f[None, :], 1, hid_p).astype(jnp.float32)
    w2_p = _pad2d(w2f, hid_p, out_p).astype(jnp.bfloat16)    # zero rows beyond hid_f
    b2_p = _pad2d(b2f[None, :], 1, out_p).astype(jnp.float32)
    return (w1_p, b1_p, w2_p, b2_p), out_f


# ---------------------------------------------------------------------------
# Batch tile selection (adaptive; keeps >=2 tiles for large B so v7x's two
# TensorCores both engage via dimension_semantics=("parallel",)).
# ---------------------------------------------------------------------------
def _choose_tb(B, block_b):
    block_b = max(SUBLANE, _round_up(block_b, SUBLANE))  # defensive: keep sublane-aligned
    if B <= block_b:
        return B                                          # single full-batch tile (full-dim block)
    return min(block_b, _round_up(pl.cdiv(B, 2), SUBLANE))


# ---------------------------------------------------------------------------
# Wrapper: no host-side padding of x; partial last batch tile handled by cdiv grid.
# ---------------------------------------------------------------------------
def _forward_padded(x_bf16, w1_p, b1_p, w2_p, b2_p, *, block_b):
    B, in_f = x_bf16.shape
    hid_p = w1_p.shape[1]
    out_p = w2_p.shape[1]
    tb = _choose_tb(B, block_b)
    grid = pl.cdiv(B, tb)

    return pl.pallas_call(
        embedding_transform2_kernel,
        grid=(grid,),
        out_shape=jax.ShapeDtypeStruct((B, out_p), jnp.float32),
        in_specs=[
            pl.BlockSpec((tb, in_f), lambda i: (i, 0)),       # x: full (unpadded) K
            pl.BlockSpec((in_f, hid_p), lambda i: (0, 0)),    # W1': resident across grid
            pl.BlockSpec((1, hid_p), lambda i: (0, 0)),
            pl.BlockSpec((hid_p, out_p), lambda i: (0, 0)),
            pl.BlockSpec((1, out_p), lambda i: (0, 0)),
        ],
        out_specs=pl.BlockSpec((tb, out_p), lambda i: (i, 0)),
        compiler_params=pltpu.CompilerParams(
            dimension_semantics=("parallel",)),
    )(x_bf16, w1_p, b1_p, w2_p, b2_p)


@functools.partial(jax.jit, static_argnames=("out_features", "block_b"))
def embedding_transform2(x, prepared, *, out_features, block_b=1024):
    w1_p, b1_p, w2_p, b2_p = prepared
    out_padded = _forward_padded(x.astype(jnp.bfloat16), w1_p, b1_p, w2_p, b2_p,
                                 block_b=block_b)
    return out_padded[:, :out_features]


# ---------------------------------------------------------------------------
# Pure-JAX reference (un-folded torch semantics, eval-mode BN, dropout=identity)
# ---------------------------------------------------------------------------
def ref_forward(x, torch_params):
    w1, b1, g1, be1, m1, v1, w2, b2, g2, be2, m2, v2 = torch_params
    h = x @ w1.T + b1
    h = (h - m1) / jnp.sqrt(v1 + BN_EPS) * g1 + be1
    h = jnp.maximum(h, 0.0)
    o = h @ w2.T + b2
    o = (o - m2) / jnp.sqrt(v2 + BN_EPS) * g2 + be2
    return o


# ---------------------------------------------------------------------------
# Deterministic parameter init (torch layout: w (out,in), b (out,), BN per-feature)
# ---------------------------------------------------------------------------
def init_params(key, in_f, hid_f, out_f):
    ks = jax.random.split(key, 12)
    bnd1 = 1.0 / (in_f ** 0.5)
    w1 = jax.random.uniform(ks[0], (hid_f, in_f), jnp.float32, -bnd1, bnd1)
    b1 = jax.random.uniform(ks[1], (hid_f,), jnp.float32, -bnd1, bnd1)
    g1 = 1.0 + 0.1 * jax.random.normal(ks[2], (hid_f,), jnp.float32)
    be1 = 0.1 * jax.random.normal(ks[3], (hid_f,), jnp.float32)
    m1 = 0.1 * jax.random.normal(ks[4], (hid_f,), jnp.float32)
    v1 = 1.0 + 0.2 * jax.random.uniform(ks[5], (hid_f,), jnp.float32)

    bnd2 = 1.0 / (hid_f ** 0.5)
    w2 = jax.random.uniform(ks[6], (out_f, hid_f), jnp.float32, -bnd2, bnd2)
    b2 = jax.random.uniform(ks[7], (out_f,), jnp.float32, -bnd2, bnd2)
    g2 = 1.0 + 0.1 * jax.random.normal(ks[8], (out_f,), jnp.float32)
    be2 = 0.1 * jax.random.normal(ks[9], (out_f,), jnp.float32)
    m2 = 0.1 * jax.random.normal(ks[10], (out_f,), jnp.float32)
    v2 = 1.0 + 0.2 * jax.random.uniform(ks[11], (out_f,), jnp.float32)
    return (w1, b1, g1, be1, m1, v1, w2, b2, g2, be2, m2, v2)


if __name__ == "__main__":
    key = jax.random.PRNGKey(0)
    kx, kp, kx2 = jax.random.split(key, 3)

    # EmbeddingTransform2(input_size=556, hidden_size=128, out_size=64)
    B, IN_F, HID_F, OUT_F = 2, 556, 128, 64
    params = init_params(kp, IN_F, HID_F, OUT_F)
    prepared, out_f = prepare_params(params)     # one-time fold/pad/cast, reused below

    # Check 1: tiny batch -> single full-batch tile (no padding anywhere on x).
    x = jax.random.normal(kx, (B, IN_F), jnp.float32)
    out = jax.block_until_ready(embedding_transform2(x, prepared, out_features=out_f))
    ref = ref_forward(x, params)
    assert out.shape == (B, OUT_F), out.shape
    # bf16 MXU inputs -> tolerances loosened vs exact-f32 parity.
    assert jnp.allclose(out, ref, atol=5e-2, rtol=5e-2)

    # Check 2: multi-tile batch grid with a masked partial last tile (grid=3 at tb=64).
    B2 = 130
    x2 = jax.random.normal(kx2, (B2, IN_F), jnp.float32)
    out2 = jax.block_until_ready(
        embedding_transform2(x2, prepared, out_features=out_f, block_b=64))
    ref2 = ref_forward(x2, params)
    assert out2.shape == (B2, OUT_F), out2.shape
    assert jnp.allclose(out2, ref2, atol=5e-2, rtol=5e-2)

    print("KERNEL_OK")
</pallas_src>

<mosaic_0001>
module attributes {stable_mosaic.version = 11 : i64} {
  func.func @embedding_transform2_kernel(%arg0: i32, %arg1: memref<2x556xbf16, #tpu.memory_space<vmem>>, %arg2: memref<556x128xbf16, #tpu.memory_space<vmem>>, %arg3: memref<1x128xf32, #tpu.memory_space<vmem>>, %arg4: memref<128x128xbf16, #tpu.memory_space<vmem>>, %arg5: memref<1x128xf32, #tpu.memory_space<vmem>>, %arg6: memref<2x128xf32, #tpu.memory_space<vmem>>) attributes {dimension_semantics = [#tpu.dimension_semantics<parallel>], iteration_bounds = array<i64: 1>, scalar_prefetch = 0 : i64, scratch_operands = 0 : i64, tpu.core_type = #tpu.core_type<tc>, window_params = [{transform_indices = @transform_0, window_bounds = array<i64: 2, 556>}, {pipeline_mode = #tpu.pipeline_mode<synchronous>, transform_indices = @transform_1, window_bounds = array<i64: 556, 128>}, {pipeline_mode = #tpu.pipeline_mode<synchronous>, transform_indices = @transform_2, window_bounds = array<i64: 1, 128>}, {pipeline_mode = #tpu.pipeline_mode<synchronous>, transform_indices = @transform_3, window_bounds = array<i64: 128, 128>}, {pipeline_mode = #tpu.pipeline_mode<synchronous>, transform_indices = @transform_4, window_bounds = array<i64: 1, 128>}, {transform_indices = @transform_5, window_bounds = array<i64: 2, 128>}]} {
    %c0 = arith.constant 0 : index
    %c0_0 = arith.constant 0 : index
    %0 = vector.load %arg1[%c0, %c0_0] : memref<2x556xbf16, #tpu.memory_space<vmem>>, vector<2x556xbf16>
    %c0_1 = arith.constant 0 : index
    %c0_2 = arith.constant 0 : index
    %1 = vector.load %arg2[%c0_1, %c0_2] : memref<556x128xbf16, #tpu.memory_space<vmem>>, vector<556x128xbf16>
    %cst = arith.constant dense<0.000000e+00> : vector<2x128xf32>
    %2 = tpu.matmul %0, %1, %cst {dimension_numbers = #tpu.dot_dimension_numbers<[1], [0], [0], [1], [0, 0, 1, 1], [], []>} : vector<2x556xbf16>, vector<556x128xbf16>, vector<2x128xf32> -> vector<2x128xf32>
    %c0_3 = arith.constant 0 : index
    %c0_4 = arith.constant 0 : index
    %3 = vector.load %arg3[%c0_3, %c0_4] : memref<1x128xf32, #tpu.memory_space<vmem>>, vector<1x128xf32>
    %4 = vector.broadcast %3 : vector<1x128xf32> to vector<2x128xf32>
    %5 = arith.addf %2, %4 : vector<2x128xf32>
    %cst_5 = arith.constant 0.000000e+00 : f32
    %6 = vector.broadcast %cst_5 : f32 to vector<2x128xf32>
    %7 = arith.maximumf %5, %6 : vector<2x128xf32>
    %8 = arith.truncf %7 : vector<2x128xf32> to vector<2x128xbf16>
    %c0_6 = arith.constant 0 : index
    %c0_7 = arith.constant 0 : index
    %9 = vector.load %arg4[%c0_6, %c0_7] : memref<128x128xbf16, #tpu.memory_space<vmem>>, vector<128x128xbf16>
    %cst_8 = arith.constant dense<0.000000e+00> : vector<2x128xf32>
    %10 = tpu.matmul %8, %9, %cst_8 {dimension_numbers = #tpu.dot_dimension_numbers<[1], [0], [0], [1], [0, 0, 1, 1], [], []>} : vector<2x128xbf16>, vector<128x128xbf16>, vector<2x128xf32> -> vector<2x128xf32>
    %c0_9 = arith.constant 0 : index
    %c0_10 = arith.constant 0 : index
    %11 = vector.load %arg5[%c0_9, %c0_10] : memref<1x128xf32, #tpu.memory_space<vmem>>, vector<1x128xf32>
    %12 = vector.broadcast %11 : vector<1x128xf32> to vector<2x128xf32>
    %13 = arith.addf %10, %12 : vector<2x128xf32>
    %c0_11 = arith.constant 0 : index
    %c0_12 = arith.constant 0 : index
    %14 = vector.load %arg6[%c0_11, %c0_12] : memref<2x128xf32, #tpu.memory_space<vmem>>, vector<2x128xf32>
    tpu.vector_store %arg6[%c0_11, %c0_12], %13 {strides = array<i32>} : memref<2x128xf32, #tpu.memory_space<vmem>>, vector<2x128xf32>,
    return
  }
  func.func @transform_0(%arg0: i32) -> (i32, i32) {
    %c0_i32 = arith.constant 0 : i32
    %c0_i32_0 = arith.constant 0 : i32
    return %arg0, %c0_i32 : i32, i32
  }
  func.func @transform_1(%arg0: i32) -> (i32, i32) {
    %c0_i32 = arith.constant 0 : i32
    %c0_i32_0 = arith.constant 0 : i32
    %c0_i32_1 = arith.constant 0 : i32
    return %c0_i32, %c0_i32_0 : i32, i32
  }
  func.func @transform_2(%arg0: i32) -> (i32, i32) {
    %c0_i32 = arith.constant 0 : i32
    %c0_i32_0 = arith.constant 0 : i32
    %c0_i32_1 = arith.constant 0 : i32
    return %c0_i32, %c0_i32_0 : i32, i32
  }
  func.func @transform_3(%arg0: i32) -> (i32, i32) {
    %c0_i32 = arith.constant 0 : i32
    %c0_i32_0 = arith.constant 0 : i32
    %c0_i32_1 = arith.constant 0 : i32
    return %c0_i32, %c0_i32_0 : i32, i32
  }
  func.func @transform_4(%arg0: i32) -> (i32, i32) {
    %c0_i32 = arith.constant 0 : i32
    %c0_i32_0 = arith.constant 0 : i32
    %c0_i32_1 = arith.constant 0 : i32
    return %c0_i32, %c0_i32_0 : i32, i32
  }
  func.func @transform_5(%arg0: i32) -> (i32, i32) {
    %c0_i32 = arith.constant 0 : i32
    %c0_i32_0 = arith.constant 0 : i32
    return %arg0, %c0_i32 : i32, i32
  }
}

</mosaic_0001>

<llo_original>
// kernel: embedding_transform2.1
$region0: #{embedding_transform2.1}
  #allocation0 [shape = 'u32[]', space=smem, size = 0x4, offset = 0x4, fixed_abs, tag = 'smem constant byte address 0x4 - core index']
  #allocation1 [shape = 'u32[144,128]{1,0:T(1,128)}', space=vmem, size = 0x12000, scoped, tag = 'internal scratch']
  %s0 = inlined_call_operand.vmem [shape: bf16[2,556], index: 0, kind: input, shape index: {}]
  %s1 = inlined_call_operand.hbm [shape: bf16[556,128], index: 1, kind: input, shape index: {}]
  %s2 = inlined_call_operand.vmem [shape: f32[1,128], index: 2, kind: input, shape index: {}]
  %s3 = inlined_call_operand.hbm [shape: bf16[128,128], index: 3, kind: input, shape index: {}]
  %s4 = inlined_call_operand.vmem [shape: f32[1,128], index: 4, kind: input, shape index: {}]
  %s5 = inlined_call_operand.hbm [shape: f32[2,128], index: 5, kind: output, shape index: {}]
  %s6 = sld [smem:[#allocation0]]
  $region38: #{embedding_transform2.1} parent=0
    _
  %s8 = ssub.s32 1, %s6
  %s9 = scalar_select 0, %s8, %s6
  $region1: #{embedding_transform2.1} parent=0
    #allocation2 [shape = 'u8[143360]{0}', space=vmem, size = 0x23000, scoped, tag = 'input window, operand 1, single buffered']
    #allocation3 [shape = 's32[1]{0}', space=sflag, size = 0x4, scoped, tag = 'scoped memory for embedding_transform2.1']
    #allocation4 [shape = 's32[1]{0}', space=sflag, size = 0x4, scoped, tag = 'scoped memory for embedding_transform2.1']
    #allocation5 [shape = 'u8[32768]{0}', space=vmem, size = 0x8000, scoped, tag = 'input window, operand 3, single buffered']
    #allocation6 [shape = 's32[1]{0}', space=sflag, size = 0x4, scoped, tag = 'scoped memory for embedding_transform2.1']
    #allocation7 [shape = 'u8[1024]{0}', space=vmem, size = 0x400, scoped, tag = 'output window, operand 0, single buffered']
    %10 = vsyncpa [#allocation3], 0
    %11 = vsyncpa [#allocation6], 0
    %12 = vsyncpa [#allocation4], 0
    // Predicated region
    $region2: #{embedding_transform2.1} parent=1 // pred_check
      _
    $region3: #{embedding_transform2.1} parent=1 // pred_check_branch
      %14 = sbr.rel (0) target = $region5
    $region4: #{embedding_transform2.1} parent=1 // pred_region
      _
    $region5: #{embedding_transform2.1} parent=1 // pred_fallthru
      _
    // Predicated region
    $region6: #{embedding_transform2.1} parent=1 // pred_check
      _
    $region7: #{embedding_transform2.1} parent=1 // pred_check_branch
      %16 = sbr.rel (0) target = $region9
    $region8: #{embedding_transform2.1} parent=1 // pred_region
      %s18 = ssub.s32 4480, 4480
      %19 = vsyncadd [#allocation3], %s18
      %s20 = sshll.u32 [#allocation2], 4
      %s21 = int_to_ptr.vmem [resolvable:$true] %s20
      %26 = dma.hbm_to_vmem [thread:$0]  %s1, 4480, %s21, [#allocation3], 64, 64, 4
    $region9: #{embedding_transform2.1} parent=1 // pred_fallthru
      _
    // Predicated region
    $region10: #{embedding_transform2.1} parent=1 // pred_check
      _
    $region11: #{embedding_transform2.1} parent=1 // pred_check_branch
      %28 = sbr.rel (0) target = $region13
    $region12: #{embedding_transform2.1} parent=1 // pred_region
      _
    $region13: #{embedding_transform2.1} parent=1 // pred_fallthru
      _
    // Predicated region
    $region14: #{embedding_transform2.1} parent=1 // pred_check
      _
    $region15: #{embedding_transform2.1} parent=1 // pred_check_branch
      %30 = sbr.rel (0) target = $region17
    $region16: #{embedding_transform2.1} parent=1 // pred_region
      %s32 = ssub.s32 1024, 1024
      %33 = vsyncadd [#allocation6], %s32
      %s34 = sshll.u32 [#allocation5], 4
      %s35 = int_to_ptr.vmem [resolvable:$true] %s34
      %40 = dma.hbm_to_vmem [thread:$0]  %s3, 1024, %s35, [#allocation6], 64, 64, 4
    $region17: #{embedding_transform2.1} parent=1 // pred_fallthru
      _
    // Predicated region
    $region18: #{embedding_transform2.1} parent=1 // pred_check
      _
    $region19: #{embedding_transform2.1} parent=1 // pred_check_branch
      %42 = sbr.rel (0) target = $region21
    $region20: #{embedding_transform2.1} parent=1 // pred_region
      _
    $region21: #{embedding_transform2.1} parent=1 // pred_fallthru
      _
    // Predicated region
    $region22: #{embedding_transform2.1} parent=1 // pred_check
      _
    $region23: #{embedding_transform2.1} parent=1 // pred_check_branch
      %44 = sbr.rel (0) target = $region25
    $region24: #{embedding_transform2.1} parent=1 // pred_region
      %45 = dma.done [#allocation3], 4480
    $region25: #{embedding_transform2.1} parent=1 // pred_fallthru
      _
    // Predicated region
    $region26: #{embedding_transform2.1} parent=1 // pred_check
      _
    $region27: #{embedding_transform2.1} parent=1 // pred_check_branch
      %47 = sbr.rel (0) target = $region29
    $region28: #{embedding_transform2.1} parent=1 // pred_region
      %48 = dma.done [#allocation6], 1024
    $region29: #{embedding_transform2.1} parent=1 // pred_fallthru
      _
    %v50 = vld [vmem:[%s0] sm:$0x1f]
    %v51 = vld [vmem:[#allocation2] sm:$0xf]
    %v52 = vld [vmem:[#allocation2 + $0x4] sm:$0xf]
    %v53 = vld [vmem:[#allocation2 + $0x8] sm:$0xf]
    %v54 = vld [vmem:[#allocation2 + $0xc] sm:$0xf]
    %v55 = vld [vmem:[#allocation2 + $0x10] sm:$0xf]
    %v56 = vld [vmem:[#allocation2 + $0x14] sm:$0xf]
    %v57 = vld [vmem:[#allocation2 + $0x18] sm:$0xf]
    %v58 = vld [vmem:[#allocation2 + $0x1c] sm:$0xf]
    %v59 = vld [vmem:[#allocation2 + $0x20] sm:$0xf]
    %v60 = vld [vmem:[#allocation2 + $0x24] sm:$0xf]
    %v61 = vld [vmem:[#allocation2 + $0x28] sm:$0xf]
    %v62 = vld [vmem:[#allocation2 + $0x2c] sm:$0xf]
    %v63 = vld [vmem:[#allocation2 + $0x30] sm:$0xf]
    %v64 = vld [vmem:[#allocation2 + $0x34] sm:$0xf]
    %v65 = vld [vmem:[#allocation2 + $0x38] sm:$0xf]
    %v66 = vld [vmem:[#allocation2 + $0x3c] sm:$0xf]
    %v67 = vld [vmem:[#allocation2 + $0x40] sm:$0xf]
    %v68 = vld [vmem:[#allocation2 + $0x44] sm:$0xf]
    %v69 = vld [vmem:[#allocation2 + $0x48] sm:$0xf]
    %v70 = vld [vmem:[#allocation2 + $0x4c] sm:$0xf]
    %v71 = vld [vmem:[#allocation2 + $0x50] sm:$0xf]
    %v72 = vld [vmem:[#allocation2 + $0x54] sm:$0xf]
    %v73 = vld [vmem:[#allocation2 + $0x58] sm:$0xf]
    %v74 = vld [vmem:[#allocation2 + $0x5c] sm:$0xf]
    %v75 = vld [vmem:[#allocation2 + $0x60] sm:$0xf]
    %v76 = vld [vmem:[#allocation2 + $0x64] sm:$0xf]
    %v77 = vld [vmem:[#allocation2 + $0x68] sm:$0xf]
    %v78 = vld [vmem:[#allocation2 + $0x6c] sm:$0xf]
    %v79 = vld [vmem:[#allocation2 + $0x70] sm:$0xf]
    %v80 = vld [vmem:[#allocation2 + $0x74] sm:$0xf]
    %v81 = vld [vmem:[#allocation2 + $0x78] sm:$0xf]
    %v82 = vld [vmem:[#allocation2 + $0x7c] sm:$0xf]
    %v83 = vld [vmem:[#allocation2 + $0x80] sm:$0xf]
    %v84 = vld [vmem:[#allocation2 + $0x84] sm:$0xf]
    %v85 = vld [vmem:[#allocation2 + $0x88] sm:$0xf]
    %v86 = vld [vmem:[#allocation2 + $0x8c] sm:$0xf]
    %v87 = vld [vmem:[#allocation2 + $0x90] sm:$0xf]
    %v88 = vld [vmem:[#allocation2 + $0x94] sm:$0xf]
    %v89 = vld [vmem:[#allocation2 + $0x98] sm:$0xf]
    %v90 = vld [vmem:[#allocation2 + $0x9c] sm:$0xf]
    %v91 = vld [vmem:[#allocation2 + $0xa0] sm:$0xf]
    %v92 = vld [vmem:[#allocation2 + $0xa4] sm:$0xf]
    %v93 = vld [vmem:[#allocation2 + $0xa8] sm:$0xf]
    %v94 = vld [vmem:[#allocation2 + $0xac] sm:$0xf]
    %v95 = vld [vmem:[#allocation2 + $0xb0] sm:$0xf]
    %v96 = vld [vmem:[#allocation2 + $0xb4] sm:$0xf]
    %v97 = vld [vmem:[#allocation2 + $0xb8] sm:$0xf]
    %v98 = vld [vmem:[#allocation2 + $0xbc] sm:$0xf]
    %v99 = vld [vmem:[#allocation2 + $0xc0] sm:$0xf]
    %v100 = vld [vmem:[#allocation2 + $0xc4] sm:$0xf]
    %v101 = vld [vmem:[#allocation2 + $0xc8] sm:$0xf]
    %v102 = vld [vmem:[#allocation2 + $0xcc] sm:$0xf]
    %v103 = vld [vmem:[#allocation2 + $0xd0] sm:$0xf]
    %v104 = vld [vmem:[#allocation2 + $0xd4] sm:$0xf]
    %v105 = vld [vmem:[#allocation2 + $0xd8] sm:$0xf]
    %v106 = vld [vmem:[#allocation2 + $0xdc] sm:$0xf]
    %v107 = vld [vmem:[#allocation2 + $0xe0] sm:$0xf]
    %v108 = vld [vmem:[#allocation2 + $0xe4] sm:$0xf]
    %v109 = vld [vmem:[#allocation2 + $0xe8] sm:$0xf]
    %v110 = vld [vmem:[#allocation2 + $0xec] sm:$0xf]
    %v111 = vld [vmem:[#allocation2 + $0xf0] sm:$0xf]
    %v112 = vld [vmem:[#allocation2 + $0xf4] sm:$0xf]
    %v113 = vld [vmem:[#allocation2 + $0xf8] sm:$0xf]
    %v114 = vld [vmem:[#allocation2 + $0xfc] sm:$0xf]
    %v115 = vld [vmem:[#allocation2 + $0x100] sm:$0xf]
    %v116 = vld [vmem:[#allocation2 + $0x104] sm:$0xf]
    %v117 = vld [vmem:[#allocation2 + $0x108] sm:$0xf]
    %v118 = vld [vmem:[#allocation2 + $0x10c] sm:$0xf]
    %v119 = vld [vmem:[#allocation2 + $0x110] sm:$0xf]
    %v120 = vld [vmem:[#allocation2 + $0x114] sm:$0x3]
    %v121 = vld [vmem:[%s2] sm:$0x1]
    %v123 = vlaneseq
    %v124 = vshrl.u32 %v123, 7
    %v125 = vsub.s32 0, %v124
    %v126 = vrot.slane %v121, %v125
    %v129 = vcombine.high %v50, %v50
    %v131 = vunpack.c.l.s4 1966171168
    %v132 = vunpack.c.0.s8 %v131
    %v133 = vlaneseq
    %v134 = vshrl.u32 %v133, 7
    %v135 = vsub.s32 %v132, %v134
    %v136 = vrot.slane %v50, %v135
    %v138 = vunpack.c.l.s4 1966171168
    %v139 = vunpack.c.0.s8 %v138
    %v140 = vlaneseq
    %v141 = vshrl.u32 %v140, 7
    %v142 = vsub.s32 %v139, %v141
    %v143 = vrot.slane %v129, %v142
    %v144 = vcombine.high %v136, %v136
    %v146 = vunpack.c.l.s4 1966171168
    %v147 = vunpack.c.0.s8 %v146
    %v148 = vlaneseq
    %v149 = vshrl.u32 %v148, 7
    %v150 = vsub.s32 %v147, %v149
    %v151 = vrot.slane %v136, %v150
    %v153 = vunpack.c.l.s4 1966171168
    %v154 = vunpack.c.0.s8 %v153
    %v155 = vlaneseq
    %v156 = vshrl.u32 %v155, 7
    %v157 = vsub.s32 %v154, %v156
    %v158 = vrot.slane %v143, %v157
    %v160 = vunpack.c.l.s4 1966171168
    %v161 = vunpack.c.0.s8 %v160
    %v162 = vlaneseq
    %v163 = vshrl.u32 %v162, 7
    %v164 = vsub.s32 %v161, %v163
    %v165 = vrot.slane %v144, %v164
    %v166 = vcombine.high %v151, %v151
    %v167 = vcombine.high %v165, %v165
    %v242 = vunpack.c.l.b16 %v51
    %v243 = vunpack.c.l.b16 %v52
    %v244 = vunpack.c.l.b16 %v53
    %v245 = vunpack.c.l.b16 %v54
    %v246 = vunpack.c.l.b16 %v55
    %v247 = vunpack.c.l.b16 %v56
    %v248 = vunpack.c.l.b16 %v57
    %v249 = vunpack.c.l.b16 %v58
    %v250 = vunpack.c.l.b16 %v59
    %v251 = vunpack.c.l.b16 %v60
    %v252 = vunpack.c.l.b16 %v61
    %v253 = vunpack.c.l.b16 %v62
    %v254 = vunpack.c.l.b16 %v63
    %v255 = vunpack.c.l.b16 %v64
    %v256 = vunpack.c.l.b16 %v65
    %v257 = vunpack.c.l.b16 %v66
    %v258 = vunpack.c.l.b16 %v67
    %v259 = vunpack.c.l.b16 %v68
    %v260 = vunpack.c.l.b16 %v69
    %v261 = vunpack.c.l.b16 %v70
    %v262 = vunpack.c.l.b16 %v71
    %v263 = vunpack.c.l.b16 %v72
    %v264 = vunpack.c.l.b16 %v73
    %v265 = vunpack.c.l.b16 %v74
    %v266 = vunpack.c.l.b16 %v75
    %v267 = vunpack.c.l.b16 %v76
    %v268 = vunpack.c.l.b16 %v77
    %v269 = vunpack.c.l.b16 %v78
    %v270 = vunpack.c.l.b16 %v79
    %v271 = vunpack.c.l.b16 %v80
    %v272 = vunpack.c.l.b16 %v81
    %v273 = vunpack.c.l.b16 %v82
    %v274 = vunpack.c.l.b16 %v83
    %v275 = vunpack.c.l.b16 %v84
    %v276 = vunpack.c.l.b16 %v85
    %v277 = vunpack.c.l.b16 %v86
    %v278 = vunpack.c.l.b16 %v87
    %v279 = vunpack.c.l.b16 %v88
    %v280 = vunpack.c.l.b16 %v89
    %v281 = vunpack.c.l.b16 %v90
    %v282 = vunpack.c.l.b16 %v91
    %v283 = vunpack.c.l.b16 %v92
    %v284 = vunpack.c.l.b16 %v93
    %v285 = vunpack.c.l.b16 %v94
    %v286 = vunpack.c.l.b16 %v95
    %v287 = vunpack.c.l.b16 %v96
    %v288 = vunpack.c.l.b16 %v97
    %v289 = vunpack.c.l.b16 %v98
    %v290 = vunpack.c.l.b16 %v99
    %v291 = vunpack.c.l.b16 %v100
    %v292 = vunpack.c.l.b16 %v101
    %v293 = vunpack.c.l.b16 %v102
    %v294 = vunpack.c.l.b16 %v103
    %v295 = vunpack.c.l.b16 %v104
    %v296 = vunpack.c.l.b16 %v105
    %v297 = vunpack.c.l.b16 %v106
    %v298 = vunpack.c.l.b16 %v107
    %v299 = vunpack.c.l.b16 %v108
    %v300 = vunpack.c.l.b16 %v109
    %v301 = vunpack.c.l.b16 %v110
    %v302 = vunpack.c.l.b16 %v111
    %v303 = vunpack.c.l.b16 %v112
    %v304 = vunpack.c.l.b16 %v113
    %v305 = vunpack.c.l.b16 %v114
    %v306 = vunpack.c.l.b16 %v115
    %v307 = vunpack.c.l.b16 %v116
    %v308 = vunpack.c.l.b16 %v117
    %v309 = vunpack.c.l.b16 %v118
    %v310 = vunpack.c.l.b16 %v119
    %v311 = vunpack.c.l.b16 %v120
    %v312 = vpack.c.b16 %v243, %v242
    %v313 = vpack.c.b16 %v245, %v244
    %v314 = vpack.c.b16 %v247, %v246
    %v315 = vpack.c.b16 %v249, %v248
    %v316 = vpack.c.b16 %v251, %v250
    %v317 = vpack.c.b16 %v253, %v252
    %v318 = vpack.c.b16 %v255, %v254
    %v319 = vpack.c.b16 %v257, %v256
    %v320 = vpack.c.b16 %v259, %v258
    %v321 = vpack.c.b16 %v261, %v260
    %v322 = vpack.c.b16 %v263, %v262
    %v323 = vpack.c.b16 %v265, %v264
    %v324 = vpack.c.b16 %v267, %v266
    %v325 = vpack.c.b16 %v269, %v268
    %v326 = vpack.c.b16 %v271, %v270
    %v327 = vpack.c.b16 %v273, %v272
    %v328 = vpack.c.b16 %v275, %v274
    %v329 = vpack.c.b16 %v277, %v276
    %v330 = vpack.c.b16 %v279, %v278
    %v331 = vpack.c.b16 %v281, %v280
    %v332 = vpack.c.b16 %v283, %v282
    %v333 = vpack.c.b16 %v285, %v284
    %v334 = vpack.c.b16 %v287, %v286
    %v335 = vpack.c.b16 %v289, %v288
    %v336 = vpack.c.b16 %v291, %v290
    %v337 = vpack.c.b16 %v293, %v292
    %v338 = vpack.c.b16 %v295, %v294
    %v339 = vpack.c.b16 %v297, %v296
    %v340 = vpack.c.b16 %v299, %v298
    %v341 = vpack.c.b16 %v301, %v300
    %v342 = vpack.c.b16 %v303, %v302
    %v343 = vpack.c.b16 %v305, %v304
    %v344 = vpack.c.b16 %v307, %v306
    %v345 = vpack.c.b16 %v309, %v308
    %v346 = vpack.c.b16 %v311, %v310
    %vm381 = vcmask 359424
    %v383 = vsel %vm381, %v158, 0
    %vm385 = vcmask 1045504
    %v387 = vsel %vm385, %v346, 0
    %389 = vmatprep.subr.bf16.mxu0 0
    %390 = vmatpush1.bf16.msra.mxu0 %v312
    %391 = vmatprep.subr.bf16.mxu0 0
    %392 = vmatpush1.bf16.msra.mxu0 %v313
    %393 = vmatprep.subr.bf16.mxu0 0
    %394 = vmatpush1.bf16.msra.mxu0 %v314
    %395 = vmatprep.subr.bf16.mxu0 0
    %396 = vmatpush1.bf16.msra.mxu0 %v315
    %397 = vmatprep.subr.bf16.mxu0 0
    %398 = vmatpush1.bf16.msra.mxu0 %v316
    %399 = vmatprep.subr.bf16.mxu0 0
    %400 = vmatpush1.bf16.msra.mxu0 %v317
    %401 = vmatprep.subr.bf16.mxu0 0
    %402 = vmatpush1.bf16.msra.mxu0 %v318
    %403 = vmatprep.subr.bf16.mxu0 0
    %404 = vmatpush1.bf16.msra.mxu0 %v319
    %405 = vmatprep.subr.bf16.mxu0 0
    %406 = vmatpush1.bf16.msra.mxu0 %v320
    %407 = vmatprep.subr.bf16.mxu0 0
    %408 = vmatpush1.bf16.msra.mxu0 %v321
    %409 = vmatprep.subr.bf16.mxu0 0
    %410 = vmatpush1.bf16.msra.mxu0 %v322
    %411 = vmatprep.subr.bf16.mxu0 0
    %412 = vmatpush1.bf16.msra.mxu0 %v323
    %413 = vmatprep.subr.bf16.mxu0 0
    %414 = vmatpush1.bf16.msra.mxu0 %v324
    %415 = vmatprep.subr.bf16.mxu0 0
    %416 = vmatpush1.bf16.msra.mxu0 %v325
    %417 = vmatprep.subr.bf16.mxu0 0
    %418 = vmatpush1.bf16.msra.mxu0 %v326
    %419 = vmatprep.subr.bf16.mxu0 0
    %420 = vmatpush1.bf16.msra.mxu0 %v327
    %421 = vmatprep.mubr.bf16.mxu0 %v165
    %422 = vmatmul.mubr.bf16.gmra.mrb[0].mxu0 %v151
    %v423 = vpop.f32.mrb[0].mxu0
    %v424 = vadd.f32 %v126, %v423
    %v425 = vpop.f32.mrb[0].mxu0
    %v426 = vpop.f32.mrb[0].mxu0
    %v427 = vpop.f32.mrb[0].mxu0
    %428 = vdwg.mxu0
    %429 = vmatprep.subr.bf16.mxu0 0
    %430 = vmatpush1.bf16.msra.mxu0 %v328
    %431 = vmatprep.subr.bf16.mxu0 0
    %432 = vmatpush1.bf16.msra.mxu0 %v329
    %433 = vmatprep.subr.bf16.mxu0 0
    %434 = vmatpush1.bf16.msra.mxu0 %v330
    %435 = vmatprep.subr.bf16.mxu0 0
    %436 = vmatpush1.bf16.msra.mxu0 %v331
    %437 = vmatprep.subr.bf16.mxu0 0
    %438 = vmatpush1.bf16.msra.mxu0 %v332
    %439 = vmatprep.subr.bf16.mxu0 0
    %440 = vmatpush1.bf16.msra.mxu0 %v333
    %441 = vmatprep.subr.bf16.mxu0 0
    %442 = vmatpush1.bf16.msra.mxu0 %v334
    %443 = vmatprep.subr.bf16.mxu0 0
    %444 = vmatpush1.bf16.msra.mxu0 %v335
    %445 = vmatprep.subr.bf16.mxu0 0
    %446 = vmatpush1.bf16.msra.mxu0 %v336
    %447 = vmatprep.subr.bf16.mxu0 0
    %448 = vmatpush1.bf16.msra.mxu0 %v337
    %449 = vmatprep.subr.bf16.mxu0 0
    %450 = vmatpush1.bf16.msra.mxu0 %v338
    %451 = vmatprep.subr.bf16.mxu0 0
    %452 = vmatpush1.bf16.msra.mxu0 %v339
    %453 = vmatprep.subr.bf16.mxu0 0
    %454 = vmatpush1.bf16.msra.mxu0 %v340
    %455 = vmatprep.subr.bf16.mxu0 0
    %456 = vmatpush1.bf16.msra.mxu0 %v341
    %457 = vmatprep.subr.bf16.mxu0 0
    %458 = vmatpush1.bf16.msra.mxu0 %v342
    %459 = vmatprep.subr.bf16.mxu0 0
    %460 = vmatpush1.bf16.msra.mxu0 %v343
    %461 = vmatprep.mubr.bf16.mxu0 %v167
    %462 = vmatmul.mubr.bf16.gmra.mrb[0].mxu0 %v166
    %v463 = vpop.f32.mrb[0].mxu0
    %v464 = vadd.f32 %v424, %v463
    %v465 = vpop.f32.mrb[0].mxu0
    %v466 = vpop.f32.mrb[0].mxu0
    %v467 = vpop.f32.mrb[0].mxu0
    %468 = vdwg.mxu0
    %469 = vmatprep.subr.bf16.mxu0 0
    %470 = vmatpush1.bf16.msra.mxu0 %v344
    %471 = vmatprep.subr.bf16.mxu0 0
    %472 = vmatpush1.bf16.msra.mxu0 %v345
    %473 = vmatprep.subr.bf16.mxu0 0
    %474 = vmatpush1.bf16.msra.mxu0 %v387
    %475 = vmatprep.subr.bf16.mxu0 0
    %476 = vmatpush1.bf16.msra.mxu0 0
    %477 = vmatprep.subr.bf16.mxu0 0
    %478 = vmatpush1.bf16.msra.mxu0 0
    %479 = vmatprep.subr.bf16.mxu0 0
    %480 = vmatpush1.bf16.msra.mxu0 0
    %481 = vmatprep.subr.bf16.mxu0 0
    %482 = vmatpush1.bf16.msra.mxu0 0
    %483 = vmatprep.subr.bf16.mxu0 0
    %484 = vmatpush1.bf16.msra.mxu0 0
    %485 = vmatprep.subr.bf16.mxu0 0
    %486 = vmatpush1.bf16.msra.mxu0 0
    %487 = vmatprep.subr.bf16.mxu0 0
    %488 = vmatpush1.bf16.msra.mxu0 0
    %489 = vmatprep.subr.bf16.mxu0 0
    %490 = vmatpush1.bf16.msra.mxu0 0
    %491 = vmatprep.subr.bf16.mxu0 0
    %492 = vmatpush1.bf16.msra.mxu0 0
    %493 = vmatprep.subr.bf16.mxu0 0
    %494 = vmatpush1.bf16.msra.mxu0 0
    %495 = vmatprep.subr.bf16.mxu0 0
    %496 = vmatpush1.bf16.msra.mxu0 0
    %497 = vmatprep.subr.bf16.mxu0 0
    %498 = vmatpush1.bf16.msra.mxu0 0
    %499 = vmatprep.subr.bf16.mxu0 0
    %500 = vmatpush1.bf16.msra.mxu0 0
    %501 = vmatprep.mubr.bf16.mxu0 0
    %502 = vmatmul.mubr.bf16.gmra.mrb[0].mxu0 %v383
    %v503 = vpop.f32.mrb[0].mxu0
    %v504 = vadd.f32 %v464, %v503
    %v505 = vpop.f32.mrb[0].mxu0
    %v506 = vpop.f32.mrb[0].mxu0
    %v507 = vpop.f32.mrb[0].mxu0
    %508 = vdwg.mxu0
    %v509 = vmax.f32 %v504, 0.0
    %v510 = vpack.c.bf16 %v509, %v509
    %v511 = vld [vmem:[#allocation5] sm:$0xf]
    %v512 = vld [vmem:[#allocation5 + $0x4] sm:$0xf]
    %v513 = vld [vmem:[#allocation5 + $0x8] sm:$0xf]
    %v514 = vld [vmem:[#allocation5 + $0xc] sm:$0xf]
    %v515 = vld [vmem:[#allocation5 + $0x10] sm:$0xf]
    %v516 = vld [vmem:[#allocation5 + $0x14] sm:$0xf]
    %v517 = vld [vmem:[#allocation5 + $0x18] sm:$0xf]
    %v518 = vld [vmem:[#allocation5 + $0x1c] sm:$0xf]
    %v519 = vld [vmem:[#allocation5 + $0x20] sm:$0xf]
    %v520 = vld [vmem:[#allocation5 + $0x24] sm:$0xf]
    %v521 = vld [vmem:[#allocation5 + $0x28] sm:$0xf]
    %v522 = vld [vmem:[#allocation5 + $0x2c] sm:$0xf]
    %v523 = vld [vmem:[#allocation5 + $0x30] sm:$0xf]
    %v524 = vld [vmem:[#allocation5 + $0x34] sm:$0xf]
    %v525 = vld [vmem:[#allocation5 + $0x38] sm:$0xf]
    %v526 = vld [vmem:[#allocation5 + $0x3c] sm:$0xf]
    %v527 = vld [vmem:[%s4] sm:$0x1]
    %v529 = vlaneseq
    %v530 = vshrl.u32 %v529, 7
    %v531 = vsub.s32 0, %v530
    %v532 = vrot.slane %v527, %v531
    %v550 = vunpack.c.l.b16 %v511
    %v551 = vunpack.c.l.b16 %v512
    %v552 = vunpack.c.l.b16 %v513
    %v553 = vunpack.c.l.b16 %v514
    %v554 = vunpack.c.l.b16 %v515
    %v555 = vunpack.c.l.b16 %v516
    %v556 = vunpack.c.l.b16 %v517
    %v557 = vunpack.c.l.b16 %v518
    %v558 = vunpack.c.l.b16 %v519
    %v559 = vunpack.c.l.b16 %v520
    %v560 = vunpack.c.l.b16 %v521
    %v561 = vunpack.c.l.b16 %v522
    %v562 = vunpack.c.l.b16 %v523
    %v563 = vunpack.c.l.b16 %v524
    %v564 = vunpack.c.l.b16 %v525
    %v565 = vunpack.c.l.b16 %v526
    %v566 = vpack.c.b16 %v551, %v550
    %v567 = vpack.c.b16 %v553, %v552
    %v568 = vpack.c.b16 %v555, %v554
    %v569 = vpack.c.b16 %v557, %v556
    %v570 = vpack.c.b16 %v559, %v558
    %v571 = vpack.c.b16 %v561, %v560
    %v572 = vpack.c.b16 %v563, %v562
    %v573 = vpack.c.b16 %v565, %v564
    %582 = vmatprep.subr.bf16.mxu0 0
    %583 = vmatpush1.bf16.msra.mxu0 %v566
    %584 = vmatprep.subr.bf16.mxu0 0
    %585 = vmatpush1.bf16.msra.mxu0 %v567
    %586 = vmatprep.subr.bf16.mxu0 0
    %587 = vmatpush1.bf16.msra.mxu0 %v568
    %588 = vmatprep.subr.bf16.mxu0 0
    %589 = vmatpush1.bf16.msra.mxu0 %v569
    %590 = vmatprep.subr.bf16.mxu0 0
    %591 = vmatpush1.bf16.msra.mxu0 %v570
    %592 = vmatprep.subr.bf16.mxu0 0
    %593 = vmatpush1.bf16.msra.mxu0 %v571
    %594 = vmatprep.subr.bf16.mxu0 0
    %595 = vmatpush1.bf16.msra.mxu0 %v572
    %596 = vmatprep.subr.bf16.mxu0 0
    %597 = vmatpush1.bf16.msra.mxu0 %v573
    %598 = vmatprep.subr.bf16.mxu0 0
    %599 = vmatpush1.bf16.msra.mxu0 0
    %600 = vmatprep.subr.bf16.mxu0 0
    %601 = vmatpush1.bf16.msra.mxu0 0
    %602 = vmatprep.subr.bf16.mxu0 0
    %603 = vmatpush1.bf16.msra.mxu0 0
    %604 = vmatprep.subr.bf16.mxu0 0
    %605 = vmatpush1.bf16.msra.mxu0 0
    %606 = vmatprep.subr.bf16.mxu0 0
    %607 = vmatpush1.bf16.msra.mxu0 0
    %608 = vmatprep.subr.bf16.mxu0 0
    %609 = vmatpush1.bf16.msra.mxu0 0
    %610 = vmatprep.subr.bf16.mxu0 0
    %611 = vmatpush1.bf16.msra.mxu0 0
    %612 = vmatprep.subr.bf16.mxu0 0
    %613 = vmatpush1.bf16.msra.mxu0 0
    %614 = vmatprep.mubr.bf16.mxu0 0
    %615 = vmatmul.mubr.bf16.gmra.mrb[0].mxu0 %v510
    %v616 = vpop.f32.mrb[0].mxu0
    %v617 = vadd.f32 %v532, %v616
    %v618 = vpop.f32.mrb[0].mxu0
    %v619 = vpop.f32.mrb[0].mxu0
    %v620 = vpop.f32.mrb[0].mxu0
    %621 = vdwg.mxu0
    %622 = vst [vmem:[#allocation7] sm:$0x3] %v617
    // Predicated region
    $region30: #{embedding_transform2.1} parent=1 // pred_check
      _
    $region31: #{embedding_transform2.1} parent=1 // pred_check_branch
      %624 = sbr.rel (0) target = $region33
    $region32: #{embedding_transform2.1} parent=1 // pred_region
      %s626 = ssub.s32 32, 32
      %627 = vsyncadd [#allocation4], %s626
      %s629 = sshll.u32 [#allocation7], 4
      %s630 = int_to_ptr.vmem [resolvable:$true] %s629
      %632 = dma.vmem_to_hbm [thread:$0]  %s630, 32, %s5, [#allocation4]
    $region33: #{embedding_transform2.1} parent=1 // pred_fallthru
      _
    // Predicated region
    $region34: #{embedding_transform2.1} parent=1 // pred_check
      _
    $region35: #{embedding_transform2.1} parent=1 // pred_check_branch
      %634 = sbr.rel (0) target = $region37
    $region36: #{embedding_transform2.1} parent=1 // pred_region
      %635 = dma.done [#allocation4], 32
    $region37: #{embedding_transform2.1} parent=1 // pred_fallthru
      _
    %636 = vsyncpa [#allocation3], 1
    %637 = vsyncpa [#allocation6], 1
    %638 = vsyncpa [#allocation4], 1

</llo_original>
